<compile_context>
chip_gen: v7x
topology: tpu7x:2x2x1
jax: 0.10.0
libtpu: 0.0.40
codegen_flags: <defaults>
</compile_context>

<pallas_src>
import functools

import jax
import jax.numpy as jnp
from jax import lax
from jax.experimental import pallas as pl
from jax.experimental.pallas import tpu as pltpu


def _cbow_kernel(B, C, T, D, block_b,
                 ctx_idx_ref, tgt_idx_ref,          # scalar-prefetch (SMEM, int32)
                 in_tab_ref, out_tab_ref, lbl_ref,  # VMEM inputs
                 partial_ref,                       # VMEM output (1,1,128)
                 ctx_sum_scr, tgt_scr):             # VMEM scratch
    base = pl.program_id(0) * block_b
    rows = jnp.minimum(block_b, B - base)           # valid batch rows this block

    # ---- Phase 1: in-kernel embedding gather into batch-on-sublane scratch ----
    def gather_row(b_local, carry):
        b = base + b_local
        # context rows: sum over the C context words
        csum = in_tab_ref[pl.ds(ctx_idx_ref[b * C + 0], 1), :]          # (1, D)
        for c in range(1, C):
            csum = csum + in_tab_ref[pl.ds(ctx_idx_ref[b * C + c], 1), :]
        ctx_sum_scr[pl.ds(b_local, 1), :] = csum
        # target rows
        for t in range(T):
            tgt_scr[t, pl.ds(b_local, 1), :] = \
                out_tab_ref[pl.ds(tgt_idx_ref[b * T + t], 1), :]
        return carry

    lax.fori_loop(0, rows, gather_row, 0)

    # ---- Phase 2: vectorized BCE-with-logits over dense (block_b, D) tiles ----
    ctx_mean = ctx_sum_scr[...] * (1.0 / C)                             # (block_b, D)

    loss = jnp.zeros((block_b, 1), jnp.float32)
    for t in range(T):
        x = jnp.sum(ctx_mean * tgt_scr[t], axis=-1, keepdims=True)      # (block_b, 1)
        y = lbl_ref[:, t:t + 1]                                         # (block_b, 1)
        # stable BCEWithLogits: max(x,0) - x*y + log1p(exp(-|x|))
        z = jnp.exp(-jnp.abs(x))
        softplus = jnp.where(z > 1e-4, jnp.log(1.0 + z), z * (1.0 - 0.5 * z))
        loss = loss + jnp.maximum(x, 0.0) - x * y + softplus

    # Mask rows beyond the valid batch (cdiv'd last block) before summing.
    valid = lax.broadcasted_iota(jnp.int32, (block_b, 1), 0) < rows
    block_sum = jnp.sum(jnp.where(valid, loss, 0.0))
    partial_ref[...] = jnp.full(partial_ref.shape, block_sum, jnp.float32)


def _pick_block_b(B, C, T, D, V, budget_bytes=16 * 1024 * 1024):
    """Largest multiple-of-8 batch tile whose f32 working set fits the budget.

    Budget covers: both tables double-buffered in f32 (fixed), plus per-batch-
    row f32 gather scratch ((1+T) rows of D), f32 temporaries and the labels
    block.  16 MiB keeps us safely under v5e's 16 MiB scoped default, v6e's
    32 MiB default and v7x's 64 MiB physical VMEM.
    """
    table_bytes = 2 * 2 * V * D * 4                     # both tables, dbl-buffered
    per_row = (1 + T) * D * 4 + 4 * D * 4 + 2 * T * 4   # scratch + temps + labels
    avail = budget_bytes - table_bytes
    b_up = -(-B // 8) * 8                               # round_up(B, 8)
    if avail <= per_row * 8:
        return 8
    tb = min(512, (avail // per_row) // 8 * 8)
    return max(8, min(tb, b_up))


def cbow_forward(in_emb, out_emb, contexts, targets, labels, block_b=None):
    """Reproduces CBOW.forward({'contexts','targets','labels'}) -> scalar loss."""
    V, D = in_emb.shape
    B, C = contexts.shape
    T = targets.shape[1]

    if block_b is None:
        block_b = _pick_block_b(B, C, T, D, V)
    assert block_b % 8 == 0, block_b
    num_blocks = pl.cdiv(B, block_b)

    # Scalar-prefetched gather indices (flattened so SMEM padding stays tiny).
    ctx_flat = contexts.reshape(-1).astype(jnp.int32)   # (B*C,)
    tgt_flat = targets.reshape(-1).astype(jnp.int32)    # (B*T,)
    labels_f = labels.astype(jnp.float32)               # (B, T)

    kernel = functools.partial(_cbow_kernel, B, C, T, D, block_b)

    grid_spec = pltpu.PrefetchScalarGridSpec(
        num_scalar_prefetch=2,
        grid=(num_blocks,),
        in_specs=[
            # Full embedding tables resident in VMEM (same block every step,
            # so they are DMA'd once, not per grid step).
            pl.BlockSpec((V, D), lambda i, ctx, tgt: (0, 0)),
            pl.BlockSpec((V, D), lambda i, ctx, tgt: (0, 0)),
            # Labels tile for this batch block.
            pl.BlockSpec((block_b, T), lambda i, ctx, tgt: (i, 0)),
        ],
        out_specs=pl.BlockSpec((1, 1, 128), lambda i, ctx, tgt: (i, 0, 0)),
        scratch_shapes=[
            pltpu.VMEM((block_b, D), jnp.float32),       # summed context rows
            pltpu.VMEM((T, block_b, D), jnp.float32),    # gathered target rows
        ],
    )

    partials = pl.pallas_call(
        kernel,
        grid_spec=grid_spec,
        out_shape=jax.ShapeDtypeStruct((num_blocks, 1, 128), jnp.float32),
        compiler_params=pltpu.CompilerParams(
            dimension_semantics=("parallel",),
            vmem_limit_bytes=32 * 1024 * 1024),
    )(ctx_flat, tgt_flat, in_emb, out_emb, labels_f)

    # Finish the mean in JAX (a handful of floats).
    return jnp.sum(partials[:, 0, 0]) / (B * T)


def cbow_reference(in_emb, out_emb, contexts, targets, labels):
    """Pure-JAX reference mirroring the PyTorch module (all f32)."""
    ctx = jnp.take(in_emb, contexts, axis=0)             # (B, C, D)
    tgt = jnp.take(out_emb, targets, axis=0)             # (B, T, D)
    ctx_mean = jnp.mean(ctx, axis=1, keepdims=True)      # (B, 1, D)
    logits = jnp.sum(ctx_mean * tgt, axis=2)             # (B, T)
    y = labels.astype(jnp.float32)
    per_elem = (jnp.maximum(logits, 0.0)
                - logits * y
                + jnp.log1p(jnp.exp(-jnp.abs(logits))))
    return jnp.mean(per_elem)


if __name__ == "__main__":
    vocab_size = 512
    embed_dim = 128     # lane-dense D (multiple of 128)
    B = 16              # batch
    C = 4               # context window size
    T = 6               # targets per example (positive + negatives)

    key = jax.random.PRNGKey(0)
    k_in, k_out, k_ctx, k_tgt, k_lbl = jax.random.split(key, 5)

    # nn.init.normal_(mean=0.0, std=0.01) for both embedding tables
    in_emb = 0.01 * jax.random.normal(k_in, (vocab_size, embed_dim), jnp.float32)
    out_emb = 0.01 * jax.random.normal(k_out, (vocab_size, embed_dim), jnp.float32)

    contexts = jax.random.randint(k_ctx, (B, C), 0, vocab_size, dtype=jnp.int32)
    targets = jax.random.randint(k_tgt, (B, T), 0, vocab_size, dtype=jnp.int32)
    labels = jax.random.bernoulli(k_lbl, 0.5, (B, T)).astype(jnp.int32)

    # block_b=8 -> 2 grid blocks: exercises the pipeline / masking and lets the
    # two v7x TensorCores split the "parallel" batch axis.
    loss = jax.block_until_ready(
        cbow_forward(in_emb, out_emb, contexts, targets, labels, block_b=8))
    ref = jax.block_until_ready(
        cbow_reference(in_emb, out_emb, contexts, targets, labels))

    assert jnp.isfinite(loss), f"non-finite loss: {loss}"
    assert abs(float(loss) - float(ref)) < 2e-5, (float(loss), float(ref))

    print("KERNEL_OK")
</pallas_src>

<mosaic_0001>
module attributes {stable_mosaic.version = 11 : i64} {
  func.func @_cbow_kernel(%arg0: i32, %arg1: memref<64xi32, #tpu.memory_space<smem>>, %arg2: memref<96xi32, #tpu.memory_space<smem>>, %arg3: memref<512x128xf32, #tpu.memory_space<vmem>>, %arg4: memref<512x128xf32, #tpu.memory_space<vmem>>, %arg5: memref<8x6xf32, #tpu.memory_space<vmem>>, %arg6: memref<1x1x128xf32, #tpu.memory_space<vmem>>, %arg7: memref<8x128xf32, #tpu.memory_space<vmem>>, %arg8: memref<6x8x128xf32, #tpu.memory_space<vmem>>) attributes {dimension_semantics = [#tpu.dimension_semantics<parallel>], iteration_bounds = array<i64: 2>, scalar_prefetch = 2 : i64, scratch_operands = 2 : i64, tpu.core_type = #tpu.core_type<tc>, window_params = [{pipeline_mode = #tpu.pipeline_mode<synchronous>, transform_indices = @transform_0, window_bounds = array<i64: 512, 128>}, {pipeline_mode = #tpu.pipeline_mode<synchronous>, transform_indices = @transform_1, window_bounds = array<i64: 512, 128>}, {transform_indices = @transform_2, window_bounds = array<i64: 8, 6>}, {transform_indices = @transform_3, window_bounds = array<i64: 1, 1, 128>}]} {
    %c8_i32 = arith.constant 8 : i32
    %0 = arith.muli %arg0, %c8_i32 : i32
    %c16_i32 = arith.constant 16 : i32
    %1 = arith.subi %c16_i32, %0 : i32
    %c8_i32_0 = arith.constant 8 : i32
    %2 = arith.minsi %c8_i32_0, %1 : i32
    %c0_i32 = arith.constant 0 : i32
    %c0_i32_1 = arith.constant 0 : i32
    %3 = arith.subi %2, %c0_i32_1 : i32
    %4 = arith.addi %c0_i32_1, %3 : i32
    %c1_i32 = arith.constant 1 : i32
    scf.for %arg9 = %c0_i32_1 to %4 step %c1_i32  : i32 {
      %182 = arith.addi %0, %arg9 : i32
      %c4_i32 = arith.constant 4 : i32
      %183 = arith.muli %182, %c4_i32 : i32
      %c0_i32_76 = arith.constant 0 : i32
      %184 = arith.addi %183, %c0_i32_76 : i32
      %185 = arith.index_cast %184 : i32 to index
      %186 = memref.load %arg1[%185] : memref<64xi32, #tpu.memory_space<smem>>
      %187 = arith.index_cast %186 : i32 to index
      %c0_77 = arith.constant 0 : index
      %188 = vector.load %arg3[%187, %c0_77] : memref<512x128xf32, #tpu.memory_space<vmem>>, vector<1x128xf32>
      %c4_i32_78 = arith.constant 4 : i32
      %189 = arith.muli %182, %c4_i32_78 : i32
      %c1_i32_79 = arith.constant 1 : i32
      %190 = arith.addi %189, %c1_i32_79 : i32
      %191 = arith.index_cast %190 : i32 to index
      %192 = memref.load %arg1[%191] : memref<64xi32, #tpu.memory_space<smem>>
      %193 = arith.index_cast %192 : i32 to index
      %c0_80 = arith.constant 0 : index
      %194 = vector.load %arg3[%193, %c0_80] : memref<512x128xf32, #tpu.memory_space<vmem>>, vector<1x128xf32>
      %195 = arith.addf %188, %194 : vector<1x128xf32>
      %c4_i32_81 = arith.constant 4 : i32
      %196 = arith.muli %182, %c4_i32_81 : i32
      %c2_i32 = arith.constant 2 : i32
      %197 = arith.addi %196, %c2_i32 : i32
      %198 = arith.index_cast %197 : i32 to index
      %199 = memref.load %arg1[%198] : memref<64xi32, #tpu.memory_space<smem>>
      %200 = arith.index_cast %199 : i32 to index
      %c0_82 = arith.constant 0 : index
      %201 = vector.load %arg3[%200, %c0_82] : memref<512x128xf32, #tpu.memory_space<vmem>>, vector<1x128xf32>
      %202 = arith.addf %195, %201 : vector<1x128xf32>
      %c4_i32_83 = arith.constant 4 : i32
      %203 = arith.muli %182, %c4_i32_83 : i32
      %c3_i32 = arith.constant 3 : i32
      %204 = arith.addi %203, %c3_i32 : i32
      %205 = arith.index_cast %204 : i32 to index
      %206 = memref.load %arg1[%205] : memref<64xi32, #tpu.memory_space<smem>>
      %207 = arith.index_cast %206 : i32 to index
      %c0_84 = arith.constant 0 : index
      %208 = vector.load %arg3[%207, %c0_84] : memref<512x128xf32, #tpu.memory_space<vmem>>, vector<1x128xf32>
      %209 = arith.addf %202, %208 : vector<1x128xf32>
      %210 = arith.index_cast %arg9 : i32 to index
      %c0_85 = arith.constant 0 : index
      %211 = vector.load %arg7[%210, %c0_85] : memref<8x128xf32, #tpu.memory_space<vmem>>, vector<1x128xf32>
      tpu.vector_store %arg7[%210, %c0_85], %209 {strides = array<i32>} : memref<8x128xf32, #tpu.memory_space<vmem>>, vector<1x128xf32>,
      %c6_i32 = arith.constant 6 : i32
      %212 = arith.muli %182, %c6_i32 : i32
      %c0_i32_86 = arith.constant 0 : i32
      %213 = arith.addi %212, %c0_i32_86 : i32
      %214 = arith.index_cast %213 : i32 to index
      %215 = memref.load %arg2[%214] : memref<96xi32, #tpu.memory_space<smem>>
      %216 = arith.index_cast %215 : i32 to index
      %c0_87 = arith.constant 0 : index
      %217 = vector.load %arg4[%216, %c0_87] : memref<512x128xf32, #tpu.memory_space<vmem>>, vector<1x128xf32>
      %c0_88 = arith.constant 0 : index
      %218 = arith.index_cast %arg9 : i32 to index
      %c0_89 = arith.constant 0 : index
      %219 = vector.load %arg8[%c0_88, %218, %c0_89] : memref<6x8x128xf32, #tpu.memory_space<vmem>>, vector<1x1x128xf32>
      %220 = vector.shape_cast %219 : vector<1x1x128xf32> to vector<1x128xf32>
      %221 = vector.shape_cast %217 : vector<1x128xf32> to vector<1x1x128xf32>
      tpu.vector_store %arg8[%c0_88, %218, %c0_89], %221 {strides = array<i32>} : memref<6x8x128xf32, #tpu.memory_space<vmem>>, vector<1x1x128xf32>,
      %c6_i32_90 = arith.constant 6 : i32
      %222 = arith.muli %182, %c6_i32_90 : i32
      %c1_i32_91 = arith.constant 1 : i32
      %223 = arith.addi %222, %c1_i32_91 : i32
      %224 = arith.index_cast %223 : i32 to index
      %225 = memref.load %arg2[%224] : memref<96xi32, #tpu.memory_space<smem>>
      %226 = arith.index_cast %225 : i32 to index
      %c0_92 = arith.constant 0 : index
      %227 = vector.load %arg4[%226, %c0_92] : memref<512x128xf32, #tpu.memory_space<vmem>>, vector<1x128xf32>
      %c1_93 = arith.constant 1 : index
      %228 = arith.index_cast %arg9 : i32 to index
      %c0_94 = arith.constant 0 : index
      %229 = vector.load %arg8[%c1_93, %228, %c0_94] : memref<6x8x128xf32, #tpu.memory_space<vmem>>, vector<1x1x128xf32>
      %230 = vector.shape_cast %229 : vector<1x1x128xf32> to vector<1x128xf32>
      %231 = vector.shape_cast %227 : vector<1x128xf32> to vector<1x1x128xf32>
      tpu.vector_store %arg8[%c1_93, %228, %c0_94], %231 {strides = array<i32>} : memref<6x8x128xf32, #tpu.memory_space<vmem>>, vector<1x1x128xf32>,
      %c6_i32_95 = arith.constant 6 : i32
      %232 = arith.muli %182, %c6_i32_95 : i32
      %c2_i32_96 = arith.constant 2 : i32
      %233 = arith.addi %232, %c2_i32_96 : i32
      %234 = arith.index_cast %233 : i32 to index
      %235 = memref.load %arg2[%234] : memref<96xi32, #tpu.memory_space<smem>>
      %236 = arith.index_cast %235 : i32 to index
      %c0_97 = arith.constant 0 : index
      %237 = vector.load %arg4[%236, %c0_97] : memref<512x128xf32, #tpu.memory_space<vmem>>, vector<1x128xf32>
      %c2_98 = arith.constant 2 : index
      %238 = arith.index_cast %arg9 : i32 to index
      %c0_99 = arith.constant 0 : index
      %239 = vector.load %arg8[%c2_98, %238, %c0_99] : memref<6x8x128xf32, #tpu.memory_space<vmem>>, vector<1x1x128xf32>
      %240 = vector.shape_cast %239 : vector<1x1x128xf32> to vector<1x128xf32>
      %241 = vector.shape_cast %237 : vector<1x128xf32> to vector<1x1x128xf32>
      tpu.vector_store %arg8[%c2_98, %238, %c0_99], %241 {strides = array<i32>} : memref<6x8x128xf32, #tpu.memory_space<vmem>>, vector<1x1x128xf32>,
      %c6_i32_100 = arith.constant 6 : i32
      %242 = arith.muli %182, %c6_i32_100 : i32
      %c3_i32_101 = arith.constant 3 : i32
      %243 = arith.addi %242, %c3_i32_101 : i32
      %244 = arith.index_cast %243 : i32 to index
      %245 = memref.load %arg2[%244] : memref<96xi32, #tpu.memory_space<smem>>
      %246 = arith.index_cast %245 : i32 to index
      %c0_102 = arith.constant 0 : index
      %247 = vector.load %arg4[%246, %c0_102] : memref<512x128xf32, #tpu.memory_space<vmem>>, vector<1x128xf32>
      %c3_103 = arith.constant 3 : index
      %248 = arith.index_cast %arg9 : i32 to index
      %c0_104 = arith.constant 0 : index
      %249 = vector.load %arg8[%c3_103, %248, %c0_104] : memref<6x8x128xf32, #tpu.memory_space<vmem>>, vector<1x1x128xf32>
      %250 = vector.shape_cast %249 : vector<1x1x128xf32> to vector<1x128xf32>
      %251 = vector.shape_cast %247 : vector<1x128xf32> to vector<1x1x128xf32>
      tpu.vector_store %arg8[%c3_103, %248, %c0_104], %251 {strides = array<i32>} : memref<6x8x128xf32, #tpu.memory_space<vmem>>, vector<1x1x128xf32>,
      %c6_i32_105 = arith.constant 6 : i32
      %252 = arith.muli %182, %c6_i32_105 : i32
      %c4_i32_106 = arith.constant 4 : i32
      %253 = arith.addi %252, %c4_i32_106 : i32
      %254 = arith.index_cast %253 : i32 to index
      %255 = memref.load %arg2[%254] : memref<96xi32, #tpu.memory_space<smem>>
      %256 = arith.index_cast %255 : i32 to index
      %c0_107 = arith.constant 0 : index
      %257 = vector.load %arg4[%256, %c0_107] : memref<512x128xf32, #tpu.memory_space<vmem>>, vector<1x128xf32>
      %c4_108 = arith.constant 4 : index
      %258 = arith.index_cast %arg9 : i32 to index
      %c0_109 = arith.constant 0 : index
      %259 = vector.load %arg8[%c4_108, %258, %c0_109] : memref<6x8x128xf32, #tpu.memory_space<vmem>>, vector<1x1x128xf32>
      %260 = vector.shape_cast %259 : vector<1x1x128xf32> to vector<1x128xf32>
      %261 = vector.shape_cast %257 : vector<1x128xf32> to vector<1x1x128xf32>
      tpu.vector_store %arg8[%c4_108, %258, %c0_109], %261 {strides = array<i32>} : memref<6x8x128xf32, #tpu.memory_space<vmem>>, vector<1x1x128xf32>,
      %c6_i32_110 = arith.constant 6 : i32
      %262 = arith.muli %182, %c6_i32_110 : i32
      %c5_i32 = arith.constant 5 : i32
      %263 = arith.addi %262, %c5_i32 : i32
      %264 = arith.index_cast %263 : i32 to index
      %265 = memref.load %arg2[%264] : memref<96xi32, #tpu.memory_space<smem>>
      %266 = arith.index_cast %265 : i32 to index
      %c0_111 = arith.constant 0 : index
      %267 = vector.load %arg4[%266, %c0_111] : memref<512x128xf32, #tpu.memory_space<vmem>>, vector<1x128xf32>
      %c5_112 = arith.constant 5 : index
      %268 = arith.index_cast %arg9 : i32 to index
      %c0_113 = arith.constant 0 : index
      %269 = vector.load %arg8[%c5_112, %268, %c0_113] : memref<6x8x128xf32, #tpu.memory_space<vmem>>, vector<1x1x128xf32>
      %270 = vector.shape_cast %269 : vector<1x1x128xf32> to vector<1x128xf32>
      %271 = vector.shape_cast %267 : vector<1x128xf32> to vector<1x1x128xf32>
      tpu.vector_store %arg8[%c5_112, %268, %c0_113], %271 {strides = array<i32>} : memref<6x8x128xf32, #tpu.memory_space<vmem>>, vector<1x1x128xf32>,
    }
    %c0 = arith.constant 0 : index
    %c0_2 = arith.constant 0 : index
    %5 = vector.load %arg7[%c0, %c0_2] : memref<8x128xf32, #tpu.memory_space<vmem>>, vector<8x128xf32>
    %cst = arith.constant 2.500000e-01 : f32
    %6 = vector.broadcast %cst : f32 to vector<8x128xf32>
    %7 = arith.mulf %5, %6 : vector<8x128xf32>
    %cst_3 = arith.constant 0.000000e+00 : f32
    %8 = vector.broadcast %cst_3 : f32 to vector<8x1xf32>
    %c0_4 = arith.constant 0 : index
    %c0_5 = arith.constant 0 : index
    %c0_6 = arith.constant 0 : index
    %9 = vector.load %arg8[%c0_4, %c0_5, %c0_6] : memref<6x8x128xf32, #tpu.memory_space<vmem>>, vector<1x8x128xf32>
    %10 = vector.shape_cast %9 : vector<1x8x128xf32> to vector<8x128xf32>
    %11 = arith.mulf %7, %10 : vector<8x128xf32>
    %cst_7 = arith.constant dense<0.000000e+00> : vector<8xf32>
    %12 = vector.multi_reduction <add>, %11, %cst_7 [1] : vector<8x128xf32> to vector<8xf32>
    %13 = vector.shape_cast %12 : vector<8xf32> to vector<8x1xf32>
    %c0_8 = arith.constant 0 : index
    %c0_9 = arith.constant 0 : index
    %14 = vector.load %arg5[%c0_8, %c0_9] : memref<8x6xf32, #tpu.memory_space<vmem>>, vector<8x1xf32>
    %15 = math.absf %13 : vector<8x1xf32>
    %cst_10 = arith.constant 0.000000e+00 : f32
    %16 = vector.broadcast %cst_10 : f32 to vector<8x1xf32>
    %17 = arith.subf %16, %15 : vector<8x1xf32>
    %18 = math.exp %17 : vector<8x1xf32>
    %cst_11 = arith.constant 9.99999974E-5 : f32
    %19 = vector.broadcast %cst_11 : f32 to vector<8x1xf32>
    %20 = arith.cmpf ogt, %18, %19 : vector<8x1xf32>
    %cst_12 = arith.constant 1.000000e+00 : f32
    %21 = vector.broadcast %cst_12 : f32 to vector<8x1xf32>
    %22 = arith.addf %21, %18 : vector<8x1xf32>
    %23 = math.log %22 : vector<8x1xf32>
    %cst_13 = arith.constant 5.000000e-01 : f32
    %24 = vector.broadcast %cst_13 : f32 to vector<8x1xf32>
    %25 = arith.mulf %24, %18 : vector<8x1xf32>
    %cst_14 = arith.constant 1.000000e+00 : f32
    %26 = vector.broadcast %cst_14 : f32 to vector<8x1xf32>
    %27 = arith.subf %26, %25 : vector<8x1xf32>
    %28 = arith.mulf %18, %27 : vector<8x1xf32>
    %29 = arith.select %20, %23, %28 : vector<8x1xi1>, vector<8x1xf32>
    %cst_15 = arith.constant 0.000000e+00 : f32
    %30 = vector.broadcast %cst_15 : f32 to vector<8x1xf32>
    %31 = arith.maximumf %13, %30 : vector<8x1xf32>
    %32 = arith.addf %8, %31 : vector<8x1xf32>
    %33 = arith.mulf %13, %14 : vector<8x1xf32>
    %34 = arith.subf %32, %33 : vector<8x1xf32>
    %35 = arith.addf %34, %29 : vector<8x1xf32>
    %c1 = arith.constant 1 : index
    %c0_16 = arith.constant 0 : index
    %c0_17 = arith.constant 0 : index
    %36 = vector.load %arg8[%c1, %c0_16, %c0_17] : memref<6x8x128xf32, #tpu.memory_space<vmem>>, vector<1x8x128xf32>
    %37 = vector.shape_cast %36 : vector<1x8x128xf32> to vector<8x128xf32>
    %38 = arith.mulf %7, %37 : vector<8x128xf32>
    %cst_18 = arith.constant dense<0.000000e+00> : vector<8xf32>
    %39 = vector.multi_reduction <add>, %38, %cst_18 [1] : vector<8x128xf32> to vector<8xf32>
    %40 = vector.shape_cast %39 : vector<8xf32> to vector<8x1xf32>
    %c0_19 = arith.constant 0 : index
    %c1_20 = arith.constant 1 : index
    %41 = vector.load %arg5[%c0_19, %c1_20] : memref<8x6xf32, #tpu.memory_space<vmem>>, vector<8x1xf32>
    %42 = math.absf %40 : vector<8x1xf32>
    %cst_21 = arith.constant 0.000000e+00 : f32
    %43 = vector.broadcast %cst_21 : f32 to vector<8x1xf32>
    %44 = arith.subf %43, %42 : vector<8x1xf32>
    %45 = math.exp %44 : vector<8x1xf32>
    %cst_22 = arith.constant 9.99999974E-5 : f32
    %46 = vector.broadcast %cst_22 : f32 to vector<8x1xf32>
    %47 = arith.cmpf ogt, %45, %46 : vector<8x1xf32>
    %cst_23 = arith.constant 1.000000e+00 : f32
    %48 = vector.broadcast %cst_23 : f32 to vector<8x1xf32>
    %49 = arith.addf %48, %45 : vector<8x1xf32>
    %50 = math.log %49 : vector<8x1xf32>
    %cst_24 = arith.constant 5.000000e-01 : f32
    %51 = vector.broadcast %cst_24 : f32 to vector<8x1xf32>
    %52 = arith.mulf %51, %45 : vector<8x1xf32>
    %cst_25 = arith.constant 1.000000e+00 : f32
    %53 = vector.broadcast %cst_25 : f32 to vector<8x1xf32>
    %54 = arith.subf %53, %52 : vector<8x1xf32>
    %55 = arith.mulf %45, %54 : vector<8x1xf32>
    %56 = arith.select %47, %50, %55 : vector<8x1xi1>, vector<8x1xf32>
    %cst_26 = arith.constant 0.000000e+00 : f32
    %57 = vector.broadcast %cst_26 : f32 to vector<8x1xf32>
    %58 = arith.maximumf %40, %57 : vector<8x1xf32>
    %59 = arith.addf %35, %58 : vector<8x1xf32>
    %60 = arith.mulf %40, %41 : vector<8x1xf32>
    %61 = arith.subf %59, %60 : vector<8x1xf32>
    %62 = arith.addf %61, %56 : vector<8x1xf32>
    %c2 = arith.constant 2 : index
    %c0_27 = arith.constant 0 : index
    %c0_28 = arith.constant 0 : index
    %63 = vector.load %arg8[%c2, %c0_27, %c0_28] : memref<6x8x128xf32, #tpu.memory_space<vmem>>, vector<1x8x128xf32>
    %64 = vector.shape_cast %63 : vector<1x8x128xf32> to vector<8x128xf32>
    %65 = arith.mulf %7, %64 : vector<8x128xf32>
    %cst_29 = arith.constant dense<0.000000e+00> : vector<8xf32>
    %66 = vector.multi_reduction <add>, %65, %cst_29 [1] : vector<8x128xf32> to vector<8xf32>
    %67 = vector.shape_cast %66 : vector<8xf32> to vector<8x1xf32>
    %c0_30 = arith.constant 0 : index
    %c2_31 = arith.constant 2 : index
    %68 = vector.load %arg5[%c0_30, %c2_31] : memref<8x6xf32, #tpu.memory_space<vmem>>, vector<8x1xf32>
    %69 = math.absf %67 : vector<8x1xf32>
    %cst_32 = arith.constant 0.000000e+00 : f32
    %70 = vector.broadcast %cst_32 : f32 to vector<8x1xf32>
    %71 = arith.subf %70, %69 : vector<8x1xf32>
    %72 = math.exp %71 : vector<8x1xf32>
    %cst_33 = arith.constant 9.99999974E-5 : f32
    %73 = vector.broadcast %cst_33 : f32 to vector<8x1xf32>
    %74 = arith.cmpf ogt, %72, %73 : vector<8x1xf32>
    %cst_34 = arith.constant 1.000000e+00 : f32
    %75 = vector.broadcast %cst_34 : f32 to vector<8x1xf32>
    %76 = arith.addf %75, %72 : vector<8x1xf32>
    %77 = math.log %76 : vector<8x1xf32>
    %cst_35 = arith.constant 5.000000e-01 : f32
    %78 = vector.broadcast %cst_35 : f32 to vector<8x1xf32>
    %79 = arith.mulf %78, %72 : vector<8x1xf32>
    %cst_36 = arith.constant 1.000000e+00 : f32
    %80 = vector.broadcast %cst_36 : f32 to vector<8x1xf32>
    %81 = arith.subf %80, %79 : vector<8x1xf32>
    %82 = arith.mulf %72, %81 : vector<8x1xf32>
    %83 = arith.select %74, %77, %82 : vector<8x1xi1>, vector<8x1xf32>
    %cst_37 = arith.constant 0.000000e+00 : f32
    %84 = vector.broadcast %cst_37 : f32 to vector<8x1xf32>
    %85 = arith.maximumf %67, %84 : vector<8x1xf32>
    %86 = arith.addf %62, %85 : vector<8x1xf32>
    %87 = arith.mulf %67, %68 : vector<8x1xf32>
    %88 = arith.subf %86, %87 : vector<8x1xf32>
    %89 = arith.addf %88, %83 : vector<8x1xf32>
    %c3 = arith.constant 3 : index
    %c0_38 = arith.constant 0 : index
    %c0_39 = arith.constant 0 : index
    %90 = vector.load %arg8[%c3, %c0_38, %c0_39] : memref<6x8x128xf32, #tpu.memory_space<vmem>>, vector<1x8x128xf32>
    %91 = vector.shape_cast %90 : vector<1x8x128xf32> to vector<8x128xf32>
    %92 = arith.mulf %7, %91 : vector<8x128xf32>
    %cst_40 = arith.constant dense<0.000000e+00> : vector<8xf32>
    %93 = vector.multi_reduction <add>, %92, %cst_40 [1] : vector<8x128xf32> to vector<8xf32>
    %94 = vector.shape_cast %93 : vector<8xf32> to vector<8x1xf32>
    %c0_41 = arith.constant 0 : index
    %c3_42 = arith.constant 3 : index
    %95 = vector.load %arg5[%c0_41, %c3_42] : memref<8x6xf32, #tpu.memory_space<vmem>>, vector<8x1xf32>
    %96 = math.absf %94 : vector<8x1xf32>
    %cst_43 = arith.constant 0.000000e+00 : f32
    %97 = vector.broadcast %cst_43 : f32 to vector<8x1xf32>
    %98 = arith.subf %97, %96 : vector<8x1xf32>
    %99 = math.exp %98 : vector<8x1xf32>
    %cst_44 = arith.constant 9.99999974E-5 : f32
    %100 = vector.broadcast %cst_44 : f32 to vector<8x1xf32>
    %101 = arith.cmpf ogt, %99, %100 : vector<8x1xf32>
    %cst_45 = arith.constant 1.000000e+00 : f32
    %102 = vector.broadcast %cst_45 : f32 to vector<8x1xf32>
    %103 = arith.addf %102, %99 : vector<8x1xf32>
    %104 = math.log %103 : vector<8x1xf32>
    %cst_46 = arith.constant 5.000000e-01 : f32
    %105 = vector.broadcast %cst_46 : f32 to vector<8x1xf32>
    %106 = arith.mulf %105, %99 : vector<8x1xf32>
    %cst_47 = arith.constant 1.000000e+00 : f32
    %107 = vector.broadcast %cst_47 : f32 to vector<8x1xf32>
    %108 = arith.subf %107, %106 : vector<8x1xf32>
    %109 = arith.mulf %99, %108 : vector<8x1xf32>
    %110 = arith.select %101, %104, %109 : vector<8x1xi1>, vector<8x1xf32>
    %cst_48 = arith.constant 0.000000e+00 : f32
    %111 = vector.broadcast %cst_48 : f32 to vector<8x1xf32>
    %112 = arith.maximumf %94, %111 : vector<8x1xf32>
    %113 = arith.addf %89, %112 : vector<8x1xf32>
    %114 = arith.mulf %94, %95 : vector<8x1xf32>
    %115 = arith.subf %113, %114 : vector<8x1xf32>
    %116 = arith.addf %115, %110 : vector<8x1xf32>
    %c4 = arith.constant 4 : index
    %c0_49 = arith.constant 0 : index
    %c0_50 = arith.constant 0 : index
    %117 = vector.load %arg8[%c4, %c0_49, %c0_50] : memref<6x8x128xf32, #tpu.memory_space<vmem>>, vector<1x8x128xf32>
    %118 = vector.shape_cast %117 : vector<1x8x128xf32> to vector<8x128xf32>
    %119 = arith.mulf %7, %118 : vector<8x128xf32>
    %cst_51 = arith.constant dense<0.000000e+00> : vector<8xf32>
    %120 = vector.multi_reduction <add>, %119, %cst_51 [1] : vector<8x128xf32> to vector<8xf32>
    %121 = vector.shape_cast %120 : vector<8xf32> to vector<8x1xf32>
    %c0_52 = arith.constant 0 : index
    %c4_53 = arith.constant 4 : index
    %122 = vector.load %arg5[%c0_52, %c4_53] : memref<8x6xf32, #tpu.memory_space<vmem>>, vector<8x1xf32>
    %123 = math.absf %121 : vector<8x1xf32>
    %cst_54 = arith.constant 0.000000e+00 : f32
    %124 = vector.broadcast %cst_54 : f32 to vector<8x1xf32>
    %125 = arith.subf %124, %123 : vector<8x1xf32>
    %126 = math.exp %125 : vector<8x1xf32>
    %cst_55 = arith.constant 9.99999974E-5 : f32
    %127 = vector.broadcast %cst_55 : f32 to vector<8x1xf32>
    %128 = arith.cmpf ogt, %126, %127 : vector<8x1xf32>
    %cst_56 = arith.constant 1.000000e+00 : f32
    %129 = vector.broadcast %cst_56 : f32 to vector<8x1xf32>
    %130 = arith.addf %129, %126 : vector<8x1xf32>
    %131 = math.log %130 : vector<8x1xf32>
    %cst_57 = arith.constant 5.000000e-01 : f32
    %132 = vector.broadcast %cst_57 : f32 to vector<8x1xf32>
    %133 = arith.mulf %132, %126 : vector<8x1xf32>
    %cst_58 = arith.constant 1.000000e+00 : f32
    %134 = vector.broadcast %cst_58 : f32 to vector<8x1xf32>
    %135 = arith.subf %134, %133 : vector<8x1xf32>
    %136 = arith.mulf %126, %135 : vector<8x1xf32>
    %137 = arith.select %128, %131, %136 : vector<8x1xi1>, vector<8x1xf32>
    %cst_59 = arith.constant 0.000000e+00 : f32
    %138 = vector.broadcast %cst_59 : f32 to vector<8x1xf32>
    %139 = arith.maximumf %121, %138 : vector<8x1xf32>
    %140 = arith.addf %116, %139 : vector<8x1xf32>
    %141 = arith.mulf %121, %122 : vector<8x1xf32>
    %142 = arith.subf %140, %141 : vector<8x1xf32>
    %143 = arith.addf %142, %137 : vector<8x1xf32>
    %c5 = arith.constant 5 : index
    %c0_60 = arith.constant 0 : index
    %c0_61 = arith.constant 0 : index
    %144 = vector.load %arg8[%c5, %c0_60, %c0_61] : memref<6x8x128xf32, #tpu.memory_space<vmem>>, vector<1x8x128xf32>
    %145 = vector.shape_cast %144 : vector<1x8x128xf32> to vector<8x128xf32>
    %146 = arith.mulf %7, %145 : vector<8x128xf32>
    %cst_62 = arith.constant dense<0.000000e+00> : vector<8xf32>
    %147 = vector.multi_reduction <add>, %146, %cst_62 [1] : vector<8x128xf32> to vector<8xf32>
    %148 = vector.shape_cast %147 : vector<8xf32> to vector<8x1xf32>
    %c0_63 = arith.constant 0 : index
    %c5_64 = arith.constant 5 : index
    %149 = vector.load %arg5[%c0_63, %c5_64] : memref<8x6xf32, #tpu.memory_space<vmem>>, vector<8x1xf32>
    %150 = math.absf %148 : vector<8x1xf32>
    %cst_65 = arith.constant 0.000000e+00 : f32
    %151 = vector.broadcast %cst_65 : f32 to vector<8x1xf32>
    %152 = arith.subf %151, %150 : vector<8x1xf32>
    %153 = math.exp %152 : vector<8x1xf32>
    %cst_66 = arith.constant 9.99999974E-5 : f32
    %154 = vector.broadcast %cst_66 : f32 to vector<8x1xf32>
    %155 = arith.cmpf ogt, %153, %154 : vector<8x1xf32>
    %cst_67 = arith.constant 1.000000e+00 : f32
    %156 = vector.broadcast %cst_67 : f32 to vector<8x1xf32>
    %157 = arith.addf %156, %153 : vector<8x1xf32>
    %158 = math.log %157 : vector<8x1xf32>
    %cst_68 = arith.constant 5.000000e-01 : f32
    %159 = vector.broadcast %cst_68 : f32 to vector<8x1xf32>
    %160 = arith.mulf %159, %153 : vector<8x1xf32>
    %cst_69 = arith.constant 1.000000e+00 : f32
    %161 = vector.broadcast %cst_69 : f32 to vector<8x1xf32>
    %162 = arith.subf %161, %160 : vector<8x1xf32>
    %163 = arith.mulf %153, %162 : vector<8x1xf32>
    %164 = arith.select %155, %158, %163 : vector<8x1xi1>, vector<8x1xf32>
    %cst_70 = arith.constant 0.000000e+00 : f32
    %165 = vector.broadcast %cst_70 : f32 to vector<8x1xf32>
    %166 = arith.maximumf %148, %165 : vector<8x1xf32>
    %167 = arith.addf %143, %166 : vector<8x1xf32>
    %168 = arith.mulf %148, %149 : vector<8x1xf32>
    %169 = arith.subf %167, %168 : vector<8x1xf32>
    %170 = arith.addf %169, %164 : vector<8x1xf32>
    %171 = tpu.iota {dimensions = array<i32: 0>} : vector<8x1xi32>
    %172 = vector.broadcast %2 : i32 to vector<8x1xi32>
    %173 = arith.cmpi slt, %171, %172 : vector<8x1xi32>
    %cst_71 = arith.constant 0.000000e+00 : f32
    %174 = vector.broadcast %cst_71 : f32 to vector<8x1xf32>
    %175 = arith.select %173, %170, %174 : vector<8x1xi1>, vector<8x1xf32>
    %176 = vector.shape_cast %175 : vector<8x1xf32> to vector<1x8x1xf32>
    %cst_72 = arith.constant dense<0.000000e+00> : vector<1xf32>
    %177 = vector.multi_reduction <add>, %176, %cst_72 [1, 2] : vector<1x8x1xf32> to vector<1xf32>
    %178 = vector.shape_cast %177 : vector<1xf32> to vector<1x1x1xf32>
    %179 = vector.extract %178[0, 0, 0] : f32 from vector<1x1x1xf32>
    %180 = vector.broadcast %179 : f32 to vector<1x1x128xf32>
    %c0_73 = arith.constant 0 : index
    %c0_74 = arith.constant 0 : index
    %c0_75 = arith.constant 0 : index
    %181 = vector.load %arg6[%c0_73, %c0_74, %c0_75] : memref<1x1x128xf32, #tpu.memory_space<vmem>>, vector<1x1x128xf32>
    tpu.vector_store %arg6[%c0_73, %c0_74, %c0_75], %180 {strides = array<i32>} : memref<1x1x128xf32, #tpu.memory_space<vmem>>, vector<1x1x128xf32>,
    return
  }
  func.func @transform_0(%arg0: i32, %arg1: memref<64xi32, #tpu.memory_space<smem>>, %arg2: memref<96xi32, #tpu.memory_space<smem>>) -> (i32, i32) {
    %c0_i32 = arith.constant 0 : i32
    %c0_i32_0 = arith.constant 0 : i32
    %c0_i32_1 = arith.constant 0 : i32
    return %c0_i32, %c0_i32_0 : i32, i32
  }
  func.func @transform_1(%arg0: i32, %arg1: memref<64xi32, #tpu.memory_space<smem>>, %arg2: memref<96xi32, #tpu.memory_space<smem>>) -> (i32, i32) {
    %c0_i32 = arith.constant 0 : i32
    %c0_i32_0 = arith.constant 0 : i32
    %c0_i32_1 = arith.constant 0 : i32
    return %c0_i32, %c0_i32_0 : i32, i32
  }
  func.func @transform_2(%arg0: i32, %arg1: memref<64xi32, #tpu.memory_space<smem>>, %arg2: memref<96xi32, #tpu.memory_space<smem>>) -> (i32, i32) {
    %c0_i32 = arith.constant 0 : i32
    %c0_i32_0 = arith.constant 0 : i32
    return %arg0, %c0_i32 : i32, i32
  }
  func.func @transform_3(%arg0: i32, %arg1: memref<64xi32, #tpu.memory_space<smem>>, %arg2: memref<96xi32, #tpu.memory_space<smem>>) -> (i32, i32, i32) {
    %c0_i32 = arith.constant 0 : i32
    %c0_i32_0 = arith.constant 0 : i32
    %c0_i32_1 = arith.constant 0 : i32
    return %arg0, %c0_i32, %c0_i32_0 : i32, i32, i32
  }
}

</mosaic_0001>

<llo_original>
// kernel: tpu_custom_call.1
$region0: #{tpu_custom_call.1}
  #allocation0 [shape = 'u32[]', space=smem, size = 0x4, offset = 0x4, fixed_abs, tag = 'smem constant byte address 0x4 - core index']
  #allocation1 [shape = 'u32[144,128]{1,0:T(1,128)}', space=vmem, size = 0x12000, scoped, tag = 'internal scratch']
  #allocation2 [shape = 'f32[8,128]{1,0:T(8,128)}', space=vmem, size = 0x1000, scoped, tag = 'scratch operand']
  #allocation3 [shape = 'f32[6,8,128]{2,1,0:T(8,128)}', space=vmem, size = 0x6000, scoped, tag = 'scratch operand']
  #allocation4 [shape = 's32[1]{0}', space=sflag, size = 0x4, scoped, tag = 'scoped memory for tpu_custom_call.1']
  #allocation5 [shape = 'u8[512]{0}', space=smem, size = 0x200, scoped, tag = 'prefetched SMEM operand 0']
  #allocation6 [shape = 'u8[512]{0}', space=smem, size = 0x200, scoped, tag = 'prefetched SMEM operand 1']
  %s0 = inlined_call_operand.vmem [shape: s32[64], index: 0, kind: input, shape index: {}]
  %s1 = inlined_call_operand.vmem [shape: s32[96], index: 1, kind: input, shape index: {}]
  %s2 = inlined_call_operand.hbm [shape: f32[512,128], index: 2, kind: input, shape index: {}]
  %s3 = inlined_call_operand.hbm [shape: f32[512,128], index: 3, kind: input, shape index: {}]
  %s4 = inlined_call_operand.vmem [shape: f32[16,6], index: 4, kind: input, shape index: {}]
  %s5 = inlined_call_operand.hbm [shape: f32[2,1,128], index: 5, kind: output, shape index: {}]
  %s6 = sld [smem:[#allocation0]]
  $region60: #{tpu_custom_call.1} parent=0
    _
  %s8 = ssub.s32 1, %s6
  %s9 = scalar_select 0, %s8, %s6
  %s10 = sshll.u32 %s0, 4
  %s11 = int_to_ptr.vmem [resolvable:$true] %s10
  %13 = dma.vmem_to_smem %s11, 16, [#allocation5], [#allocation4]
  %s14 = sshll.u32 %s1, 4
  %s15 = int_to_ptr.vmem [resolvable:$true] %s14
  %17 = dma.vmem_to_smem %s15, 16, [#allocation6], [#allocation4]
  %18 = dma.done [#allocation4], 32
  %19 = sfence
  $region1: #{tpu_custom_call.1} parent=0
    #allocation7 [shape = 'u8[262144]{0}', space=vmem, size = 0x40000, scoped, tag = 'input window, operand 2, single buffered']
    #allocation8 [shape = 's32[2]{0}', space=sflag, size = 0x8, scoped, tag = 'scoped memory for tpu_custom_call.1']
    #allocation9 [shape = 's32[2]{0}', space=sflag, size = 0x8, scoped, tag = 'scoped memory for tpu_custom_call.1']
    #allocation10 [shape = 'u8[262144]{0}', space=vmem, size = 0x40000, scoped, tag = 'input window, operand 3, single buffered']
    #allocation11 [shape = 's32[1]{0}', space=sflag, size = 0x4, scoped, tag = 'scoped memory for tpu_custom_call.1']
    #allocation12 [shape = 'u8[1024]{0}', space=vmem, size = 0x400, scoped, tag = 'output window, operand 0']
    %20 = vsyncpa [#allocation8], 0
    %21 = vsyncpa [#allocation11], 0
    %22 = vsyncpa [#allocation9], 0
    %s23 = scalar_lea.sflag [#allocation9], 1
    %24 = vsyncpa %s23, 0
    loop: start=0, step=1, limit=4
    $region2: #{tpu_custom_call.1} parent=1 // loop_pre_header
      _
    $region3: #{tpu_custom_call.1} parent=1 // loop_header
      %s26 = sphi 0, %s30
      %p27 = scmp.ge.s32.totalorder %s26, 4
      %s34 = sphi 0, %s34
      %s36 = sphi 0, %s34
      %s37 = sphi 0, %s36
      %s51 = sphi 0, %s37
      %s55 = sphi 0, %s55
      %s57 = sphi 0, %s55
      %s58 = sphi 0, %s57
      %s72 = sphi 0, %s58
      %s78 = sphi 0, %s80
      %s81 = sphi 0, %s78
      %s82 = sphi 0, %s81
      %s98 = sphi 0, %s82
      %s104 = sphi 0, %s106
      %s107 = sphi 0, %s104
      %s108 = sphi 0, %s107
      %s124 = sphi 0, %s108
    $region4: #{tpu_custom_call.1} parent=1 // loop_header_branch
      %29 = sbr.rel (%p27) target = $region8
    $region5: #{tpu_custom_call.1} parent=1 // loop_body
      %s31 = ssub.s32 %s26, 1
      %s32 = ssub.s32 %s26, 2
      %s33 = sadd.s32 %s26, 1
      %s35 = sadd.s32 %s34, 1
      %p38 = scmp.eq.s32.totalorder %s26, 1
      %p39 = scmp.ne.s32.totalorder %s34, %s36
      %p40 = scmp.eq.s32.totalorder %s26, 0
      %p41 = por %p39, %p40
      %p42 = scmp.ne.s32.totalorder %s34, %s36
      %p43 = scmp.eq.s32.totalorder %s31, 1
      %p44 = por %p42, %p43
      %p45 = scmp.ne.s32.totalorder %s36, %s37
      %p46 = scmp.eq.s32.totalorder %s31, 0
      %p47 = por %p45, %p46
      %p48 = scmp.ne.s32.totalorder %s36, %s37
      %p49 = scmp.eq.s32.totalorder %s32, 1
      %p50 = por %p48, %p49
      %p52 = scmp.ne.s32.totalorder %s37, %s51
      %p53 = scmp.eq.s32.totalorder %s32, 0
      %p54 = por %p52, %p53
      %s56 = sadd.s32 %s55, 1
      %p59 = scmp.eq.s32.totalorder %s26, 1
      %p60 = scmp.ne.s32.totalorder %s55, %s57
      %p61 = scmp.eq.s32.totalorder %s26, 0
      %p62 = por %p60, %p61
      %p63 = scmp.ne.s32.totalorder %s55, %s57
      %p64 = scmp.eq.s32.totalorder %s31, 1
      %p65 = por %p63, %p64
      %p66 = scmp.ne.s32.totalorder %s57, %s58
      %p67 = scmp.eq.s32.totalorder %s31, 0
      %p68 = por %p66, %p67
      %p69 = scmp.ne.s32.totalorder %s57, %s58
      %p70 = scmp.eq.s32.totalorder %s32, 1
      %p71 = por %p69, %p70
      %p73 = scmp.ne.s32.totalorder %s58, %s72
      %p74 = scmp.eq.s32.totalorder %s32, 0
      %p75 = por %p73, %p74
      %s76 = ssub.s32 %s26, %s33
      %p77 = scmp.eq.s32.totalorder %s76, 0
      %s79 = sadd.s32 %s78, 1
      %s80 = scalar_select %p77, %s78, %s79
      %p83 = pneg %p77
      %p84 = scmp.eq.s32.totalorder %s26, 1
      %p85 = por %p83, %p84
      %p86 = scmp.ne.s32.totalorder %s78, %s81
      %p87 = scmp.eq.s32.totalorder %s26, 0
      %p88 = por %p86, %p87
      %p89 = scmp.ne.s32.totalorder %s78, %s81
      %p90 = scmp.eq.s32.totalorder %s31, 1
      %p91 = por %p89, %p90
      %p92 = scmp.ne.s32.totalorder %s81, %s82
      %p93 = scmp.eq.s32.totalorder %s31, 0
      %p94 = por %p92, %p93
      %p95 = scmp.ne.s32.totalorder %s81, %s82
      %p96 = scmp.eq.s32.totalorder %s32, 1
      %p97 = por %p95, %p96
      %p99 = scmp.ne.s32.totalorder %s82, %s98
      %p100 = scmp.eq.s32.totalorder %s32, 0
      %p101 = por %p99, %p100
      %s102 = ssub.s32 %s26, %s33
      %p103 = scmp.eq.s32.totalorder %s102, 0
      %s105 = sadd.s32 %s104, 1
      %s106 = scalar_select %p103, %s104, %s105
      %p109 = pneg %p103
      %p110 = scmp.eq.s32.totalorder %s26, 1
      %p111 = por %p109, %p110
      %p112 = scmp.ne.s32.totalorder %s104, %s107
      %p113 = scmp.eq.s32.totalorder %s26, 0
      %p114 = por %p112, %p113
      %p115 = scmp.ne.s32.totalorder %s104, %s107
      %p116 = scmp.eq.s32.totalorder %s31, 1
      %p117 = por %p115, %p116
      %p118 = scmp.ne.s32.totalorder %s107, %s108
      %p119 = scmp.eq.s32.totalorder %s31, 0
      %p120 = por %p118, %p119
      %p121 = scmp.ne.s32.totalorder %s107, %s108
      %p122 = scmp.eq.s32.totalorder %s32, 1
      %p123 = por %p121, %p122
      %p125 = scmp.ne.s32.totalorder %s108, %s124
      %p126 = scmp.eq.s32.totalorder %s32, 0
      %p127 = por %p125, %p126
      %p128 = scmp.le.s32.totalorder 1, %s26
      %p129 = scmp.lt.s32.totalorder %s26, 3
      %p130 = pnand %p128, %p129
      %p131 = pneg %p130
      // Predicated region
      $region9: #{tpu_custom_call.1} parent=5 // pred_check
        _
      $region10: #{tpu_custom_call.1} parent=5 // pred_check_branch
        %133 = sbr.rel (%p130) target = $region12
      $region11: #{tpu_custom_call.1} parent=5 // pred_region
        %s134 = ssub.s32 %s26, 1
        // Predicated region
        $region13: #{tpu_custom_call.1} parent=11 // pred_check
          %p135 = pneg %p47
        $region14: #{tpu_custom_call.1} parent=11 // pred_check_branch
          %137 = sbr.rel (%p135) target = $region16
        $region15: #{tpu_custom_call.1} parent=11 // pred_region
          %s139 = ssub.s32 8192, 8192
          %140 = vsyncadd [#allocation8], %s139
          %s141 = sshll.u32 [#allocation7], 4
          %s142 = int_to_ptr.vmem [resolvable:$true] %s141
          %147 = dma.hbm_to_vmem [thread:$0]  %s2, 8192, %s142, [#allocation8], 128, 128, 8
        $region16: #{tpu_custom_call.1} parent=11 // pred_fallthru
          _
        // Predicated region
        $region17: #{tpu_custom_call.1} parent=11 // pred_check
          %p148 = pneg %p68
        $region18: #{tpu_custom_call.1} parent=11 // pred_check_branch
          %150 = sbr.rel (%p148) target = $region20
        $region19: #{tpu_custom_call.1} parent=11 // pred_region
          %s152 = ssub.s32 8192, 8192
          %153 = vsyncadd [#allocation11], %s152
          %s154 = sshll.u32 [#allocation10], 4
          %s155 = int_to_ptr.vmem [resolvable:$true] %s154
          %160 = dma.hbm_to_vmem [thread:$0]  %s3, 8192, %s155, [#allocation11], 128, 128, 8
        $region20: #{tpu_custom_call.1} parent=11 // pred_fallthru
          _
      $region12: #{tpu_custom_call.1} parent=5 // pred_fallthru
        _
      %p161 = scmp.lt.s32.totalorder %s26, 2
      // Predicated region
      $region21: #{tpu_custom_call.1} parent=5 // pred_check
        %p162 = pneg %p161
      $region22: #{tpu_custom_call.1} parent=5 // pred_check_branch
        %164 = sbr.rel (%p162) target = $region24
      $region23: #{tpu_custom_call.1} parent=5 // pred_region
        // Predicated region
        $region25: #{tpu_custom_call.1} parent=23 // pred_check
          %p165 = pneg %p88
        $region26: #{tpu_custom_call.1} parent=23 // pred_check_branch
          %167 = sbr.rel (%p165) target = $region28
        $region27: #{tpu_custom_call.1} parent=23 // pred_region
          %p168 = scmp.lt.s32.totalorder %s26, 1
          %s169 = scalar_select %p168, %s26, 1
          %s170 = smul.addr %s169, 8
          %s171 = scalar_lea.vmem %s4, %s170
        $region28: #{tpu_custom_call.1} parent=23 // pred_fallthru
          _
      $region24: #{tpu_custom_call.1} parent=5 // pred_fallthru
        _
      %p172 = scmp.le.s32.totalorder 1, %s26
      %p173 = scmp.lt.s32.totalorder %s26, 3
      %p174 = pnand %p172, %p173
      %p175 = pneg %p174
      // Predicated region
      $region29: #{tpu_custom_call.1} parent=5 // pred_check
        _
      $region30: #{tpu_custom_call.1} parent=5 // pred_check_branch
        %177 = sbr.rel (%p174) target = $region32
      $region31: #{tpu_custom_call.1} parent=5 // pred_region
        %s178 = ssub.s32 %s26, 1
        // Predicated region
        $region33: #{tpu_custom_call.1} parent=31 // pred_check
          %p179 = pneg %p47
        $region34: #{tpu_custom_call.1} parent=31 // pred_check_branch
          %181 = sbr.rel (%p179) target = $region36
        $region35: #{tpu_custom_call.1} parent=31 // pred_region
          %182 = dma.done [#allocation8], 8192
        $region36: #{tpu_custom_call.1} parent=31 // pred_fallthru
          _
        // Predicated region
        $region37: #{tpu_custom_call.1} parent=31 // pred_check
          %p183 = pneg %p68
        $region38: #{tpu_custom_call.1} parent=31 // pred_check_branch
          %185 = sbr.rel (%p183) target = $region40
        $region39: #{tpu_custom_call.1} parent=31 // pred_region
          %186 = dma.done [#allocation11], 8192
        $region40: #{tpu_custom_call.1} parent=31 // pred_fallthru
          _
        %p187 = pneg %p47
        %p188 = pneg %p44
        %p189 = pneg %p68
        %p190 = pneg %p65
        %p191 = scmp.lt.s32.totalorder %s31, 1
        %s192 = scalar_select %p191, %s31, 1
        %s193 = smul.addr %s192, 8
        %s194 = scalar_lea.vmem %s4, %s193
        %p195 = pneg %p94
        %p196 = pneg %p91
        %p197 = pneg %p120
        %p198 = pneg %p117
        %s199 = sand.u32 %s107, 1
        %s200 = scalar_lea.sflag [#allocation9], %s199
        %s201 = sand.u32 %s107, 1
        %s202 = scalar_lea.vmem [#allocation12], %s201
        %p203 = scmp.lt.s32.totalorder %s31, 1
        %s204 = scalar_select %p203, %s31, 1
        %s205 = smul.addr %s204, 8
        %s206 = scalar_lea.vmem %s4, %s205
        %s207 = smul.u32 %s31, 8
        %s208 = ssub.s32 16, %s207
        %p209 = scmp.lt.s32.totalorder %s208, 8
        %s210 = scalar_select %p209, %s208, 8
        // While loop
        $region41: #{tpu_custom_call.1} parent=31 // loop_pre_header
          _
        $region42: #{tpu_custom_call.1} parent=31 // loop_header
          %s212 = sphi 0, %s214
          %p213 = scmp.ge.s32.totalorder %s212, %s210
        $region43: #{tpu_custom_call.1} parent=31 // loop_header_branch
          %216 = sbr.rel (%p213) target = $region47
        $region44: #{tpu_custom_call.1} parent=31 // loop_body
          %s217 = sadd.s32 %s207, %s212
          %s218 = smul.u32 %s217, 4
          %s219 = sld [smem:[#allocation5 + %s218]]
          %s220 = scalar_lea.vmem [#allocation7], %s219
          %v221 = vld [vmem:[%s220] sm:$0x1]
          %s222 = sadd.s32 %s218, 1
          %s223 = sld [smem:[#allocation5 + %s222]]
          %s224 = scalar_lea.vmem [#allocation7], %s223
          %v225 = vld [vmem:[%s224] sm:$0x1]
          %v226 = vadd.f32 %v221, %v225
          %s227 = sadd.s32 %s218, 2
          %s228 = sld [smem:[#allocation5 + %s227]]
          %s229 = scalar_lea.vmem [#allocation7], %s228
          %v230 = vld [vmem:[%s229] sm:$0x1]
          %v231 = vadd.f32 %v226, %v230
          %s232 = sadd.s32 %s218, 3
          %s233 = sld [smem:[#allocation5 + %s232]]
          %s234 = scalar_lea.vmem [#allocation7], %s233
          %v235 = vld [vmem:[%s234] sm:$0x1]
          %v236 = vadd.f32 %v231, %v235
          %s237 = scalar_lea.vmem [#allocation2], %s212
          %238 = vst [vmem:[%s237] sm:$0x1] %v236
          %s239 = smul.u32 %s217, 6
          %s240 = sld [smem:[#allocation6 + %s239]]
          %s241 = scalar_lea.vmem [#allocation10], %s240
          %v242 = vld [vmem:[%s241] sm:$0x1]
          %s243 = scalar_lea.vmem [#allocation3], %s212
          %244 = vst [vmem:[%s243] sm:$0x1] %v242
          %s245 = sadd.s32 %s239, 1
          %s246 = sld [smem:[#allocation6 + %s245]]
          %s247 = scalar_lea.vmem [#allocation10], %s246
          %v248 = vld [vmem:[%s247] sm:$0x1]
          %s249 = sadd.s32 %s212, 8
          %s250 = scalar_lea.vmem [#allocation3], %s249
          %251 = vst [vmem:[%s250] sm:$0x1] %v248
          %s252 = sadd.s32 %s239, 2
          %s253 = sld [smem:[#allocation6 + %s252]]
          %s254 = scalar_lea.vmem [#allocation10], %s253
          %v255 = vld [vmem:[%s254] sm:$0x1]
          %s256 = sadd.s32 %s212, 16
          %s257 = scalar_lea.vmem [#allocation3], %s256
          %258 = vst [vmem:[%s257] sm:$0x1] %v255
          %s259 = sadd.s32 %s239, 3
          %s260 = sld [smem:[#allocation6 + %s259]]
          %s261 = scalar_lea.vmem [#allocation10], %s260
          %v262 = vld [vmem:[%s261] sm:$0x1]
          %s263 = sadd.s32 %s212, 24
          %s264 = scalar_lea.vmem [#allocation3], %s263
          %265 = vst [vmem:[%s264] sm:$0x1] %v262
          %s266 = sadd.s32 %s239, 4
          %s267 = sld [smem:[#allocation6 + %s266]]
          %s268 = scalar_lea.vmem [#allocation10], %s267
          %v269 = vld [vmem:[%s268] sm:$0x1]
          %s270 = sadd.s32 %s212, 32
          %s271 = scalar_lea.vmem [#allocation3], %s270
          %272 = vst [vmem:[%s271] sm:$0x1] %v269
          %s273 = sadd.s32 %s239, 5
          %s274 = sld [smem:[#allocation6 + %s273]]
          %s275 = scalar_lea.vmem [#allocation10], %s274
          %v276 = vld [vmem:[%s275] sm:$0x1]
          %s277 = sadd.s32 %s212, 40
          %s278 = scalar_lea.vmem [#allocation3], %s277
          %279 = vst [vmem:[%s278] sm:$0x1] %v276
        $region45: #{tpu_custom_call.1} parent=31 // loop_footer
          %s214 = sadd.s32 %s212, 1
        $region46: #{tpu_custom_call.1} parent=31 // loop_footer_branch
          %211 = sbr.rel target = $region42
        $region47: #{tpu_custom_call.1} parent=31 // loop_exit
          _
        %v280 = vld [vmem:[#allocation2] sm:$0xff]
        %v281 = vmul.f32 %v280, 0.25
        %v282 = vld [vmem:[#allocation3] sm:$0xff]
        %v283 = vmul.f32 %v281, %v282
        %284 = vadd.xlane.f32.xlu0 %v283
        %v285 = vpop.xlane.xlu0 %284
        %v286 = vld [vmem:[%s206] sm:$0xff]
        %v287 = vand.u32 2147483647, %v285
        %v288 = vsub.f32 0.0, %v287
        %v289 = vmul.f32 %v288, 1.442695
        %v290 = vpow.pop %v289
        %vm291 = vcmp.gt.f32.partialorder %v290, 0.0001
        %v292 = vadd.f32 %v290, 1.0
        %v293 = vlog2.pop %v292
        %v294 = vmul.f32 %v293, 0.6931472
        %v295 = vmul.f32 %v290, 0.5
        %v296 = vsub.f32 1.0, %v295
        %v297 = vmul.f32 %v290, %v296
        %v298 = vsel %vm291, %v294, %v297
        %v299 = vmax.f32 %v285, 0.0
        %v300 = vadd.f32 %v299, 0.0
        %v301 = vmul.f32 %v285, %v286
        %v302 = vsub.f32 %v300, %v301
        %v303 = vadd.f32 %v302, %v298
        %s304 = scalar_lea.vmem [#allocation3], 8
        %v305 = vld [vmem:[%s304] sm:$0xff]
        %v306 = vmul.f32 %v281, %v305
        %307 = vadd.xlane.f32.xlu0 %v306
        %v308 = vpop.xlane.xlu0 %307
        %v309 = vand.u32 2147483647, %v308
        %v310 = vsub.f32 0.0, %v309
        %v311 = vmul.f32 %v310, 1.442695
        %v312 = vpow.pop %v311
        %vm313 = vcmp.gt.f32.partialorder %v312, 0.0001
        %v314 = vadd.f32 %v312, 1.0
        %v315 = vlog2.pop %v314
        %v316 = vmul.f32 %v315, 0.6931472
        %v317 = vmul.f32 %v312, 0.5
        %v318 = vsub.f32 1.0, %v317
        %v319 = vmul.f32 %v312, %v318
        %v320 = vsel %vm313, %v316, %v319
        %v321 = vmax.f32 %v308, 0.0
        %v322 = vadd.f32 %v303, %v321
        %v323 = vmul.f32 %v308, %v286
        %325 = vrot.lane.b32.xlu0 %v323, 127
        %v326 = vpop.permute.xlu0 %325
        %v328 = vsub.f32 %v322, %v326
        %v329 = vadd.f32 %v328, %v320
        %s330 = scalar_lea.vmem [#allocation3], 16
        %v331 = vld [vmem:[%s330] sm:$0xff]
        %v332 = vmul.f32 %v281, %v331
        %333 = vadd.xlane.f32.xlu0 %v332
        %v334 = vpop.xlane.xlu0 %333
        %v335 = vand.u32 2147483647, %v334
        %v336 = vsub.f32 0.0, %v335
        %v337 = vmul.f32 %v336, 1.442695
        %v338 = vpow.pop %v337
        %vm339 = vcmp.gt.f32.partialorder %v338, 0.0001
        %v340 = vadd.f32 %v338, 1.0
        %v341 = vlog2.pop %v340
        %v342 = vmul.f32 %v341, 0.6931472
        %v343 = vmul.f32 %v338, 0.5
        %v344 = vsub.f32 1.0, %v343
        %v345 = vmul.f32 %v338, %v344
        %v346 = vsel %vm339, %v342, %v345
        %v347 = vmax.f32 %v334, 0.0
        %v348 = vadd.f32 %v329, %v347
        %v349 = vmul.f32 %v334, %v286
        %351 = vrot.lane.b32.xlu0 %v349, 126
        %v352 = vpop.permute.xlu0 %351
        %v354 = vsub.f32 %v348, %v352
        %v355 = vadd.f32 %v354, %v346
        %s356 = scalar_lea.vmem [#allocation3], 24
        %v357 = vld [vmem:[%s356] sm:$0xff]
        %v358 = vmul.f32 %v281, %v357
        %359 = vadd.xlane.f32.xlu0 %v358
        %v360 = vpop.xlane.xlu0 %359
        %v361 = vand.u32 2147483647, %v360
        %v362 = vsub.f32 0.0, %v361
        %v363 = vmul.f32 %v362, 1.442695
        %v364 = vpow.pop %v363
        %vm365 = vcmp.gt.f32.partialorder %v364, 0.0001
        %v366 = vadd.f32 %v364, 1.0
        %v367 = vlog2.pop %v366
        %v368 = vmul.f32 %v367, 0.6931472
        %v369 = vmul.f32 %v364, 0.5
        %v370 = vsub.f32 1.0, %v369
        %v371 = vmul.f32 %v364, %v370
        %v372 = vsel %vm365, %v368, %v371
        %v373 = vmax.f32 %v360, 0.0
        %v374 = vadd.f32 %v355, %v373
        %v375 = vmul.f32 %v360, %v286
        %377 = vrot.lane.b32.xlu0 %v375, 125
        %v378 = vpop.permute.xlu0 %377
        %v380 = vsub.f32 %v374, %v378
        %v381 = vadd.f32 %v380, %v372
        %s382 = scalar_lea.vmem [#allocation3], 32
        %v383 = vld [vmem:[%s382] sm:$0xff]
        %v384 = vmul.f32 %v281, %v383
        %385 = vadd.xlane.f32.xlu0 %v384
        %v386 = vpop.xlane.xlu0 %385
        %v387 = vand.u32 2147483647, %v386
        %v388 = vsub.f32 0.0, %v387
        %v389 = vmul.f32 %v388, 1.442695
        %v390 = vpow.pop %v389
        %vm391 = vcmp.gt.f32.partialorder %v390, 0.0001
        %v392 = vadd.f32 %v390, 1.0
        %v393 = vlog2.pop %v392
        %v394 = vmul.f32 %v393, 0.6931472
        %v395 = vmul.f32 %v390, 0.5
        %v396 = vsub.f32 1.0, %v395
        %v397 = vmul.f32 %v390, %v396
        %v398 = vsel %vm391, %v394, %v397
        %v399 = vmax.f32 %v386, 0.0
        %v400 = vadd.f32 %v381, %v399
        %v401 = vmul.f32 %v386, %v286
        %403 = vrot.lane.b32.xlu0 %v401, 124
        %v404 = vpop.permute.xlu0 %403
        %v406 = vsub.f32 %v400, %v404
        %v407 = vadd.f32 %v406, %v398
        %s408 = scalar_lea.vmem [#allocation3], 40
        %v409 = vld [vmem:[%s408] sm:$0xff]
        %v410 = vmul.f32 %v281, %v409
        %411 = vadd.xlane.f32.xlu0 %v410
        %v412 = vpop.xlane.xlu0 %411
        %v413 = vand.u32 2147483647, %v412
        %v414 = vsub.f32 0.0, %v413
        %v415 = vmul.f32 %v414, 1.442695
        %v416 = vpow.pop %v415
        %vm417 = vcmp.gt.f32.partialorder %v416, 0.0001
        %v418 = vadd.f32 %v416, 1.0
        %v419 = vlog2.pop %v418
        %v420 = vmul.f32 %v419, 0.6931472
        %v421 = vmul.f32 %v416, 0.5
        %v422 = vsub.f32 1.0, %v421
        %v423 = vmul.f32 %v416, %v422
        %v424 = vsel %vm417, %v420, %v423
        %v425 = vmax.f32 %v412, 0.0
        %v426 = vadd.f32 %v407, %v425
        %v427 = vmul.f32 %v412, %v286
        %429 = vrot.lane.b32.xlu0 %v427, 123
        %v430 = vpop.permute.xlu0 %429
        %v432 = vsub.f32 %v426, %v430
        %v433 = vadd.f32 %v432, %v424
        %v434 = vlaneseq
        %v435 = vshrl.u32 %v434, 7
        %v436 = vstv %s210
        %vm437 = vcmp.lt.s32.totalorder %v435, %v436
        %v438 = vsel %vm437, %v433, 0.0
        %vm439 = vcmask 7168
        %v440 = vsel %vm439, %v438, 0.0
        %441 = vadd.xlane.f32.xlu0 %v440
        %v442 = vpop.xlane.xlu0 %441
        %v443 = vrot.slane %v442, 4
        %v444 = vadd.f32 %v442, %v443
        %v445 = vrot.slane %v444, 2
        %v446 = vadd.f32 %v444, %v445
        %v447 = vrot.slane %v446, 1
        %v448 = vadd.f32 %v446, %v447
        %s449 = vtos %v448
        %v450 = vstv %s449
        %451 = vst [vmem:[%s202] sm:$0x1] %v450
        %s452 = sand.u32 %s107, 1
        %s453 = scalar_lea.sflag [#allocation9], %s452
        %s454 = sand.u32 %s107, 1
        %s455 = scalar_lea.vmem [#allocation12], %s454
        // Predicated region
        $region48: #{tpu_custom_call.1} parent=31 // pred_check
          %p456 = pneg %p117
        $region49: #{tpu_custom_call.1} parent=31 // pred_check_branch
          %458 = sbr.rel (%p456) target = $region51
        $region50: #{tpu_custom_call.1} parent=31 // pred_region
          %s460 = ssub.s32 16, 16
          %461 = vsyncadd %s453, %s460
          %s462 = smul.addr %s31, 16
          %s463 = scalar_lea.hbm %s5, %s462
          %s465 = sshll.u32 %s455, 4
          %s466 = int_to_ptr.vmem [resolvable:$true] %s465
          %468 = dma.vmem_to_hbm [thread:$0]  %s466, 16, %s463, %s453
        $region51: #{tpu_custom_call.1} parent=31 // pred_fallthru
          _
      $region32: #{tpu_custom_call.1} parent=5 // pred_fallthru
        _
      %p469 = scmp.le.s32.totalorder 2, %s26
      // Predicated region
      $region52: #{tpu_custom_call.1} parent=5 // pred_check
        %p470 = pneg %p469
      $region53: #{tpu_custom_call.1} parent=5 // pred_check_branch
        %472 = sbr.rel (%p470) target = $region55
      $region54: #{tpu_custom_call.1} parent=5 // pred_region
        %s473 = ssub.s32 %s26, 2
        // Predicated region
        $region56: #{tpu_custom_call.1} parent=54 // pred_check
          %p474 = pneg %p123
        $region57: #{tpu_custom_call.1} parent=54 // pred_check_branch
          %476 = sbr.rel (%p474) target = $region59
        $region58: #{tpu_custom_call.1} parent=54 // pred_region
          %s477 = sand.u32 %s108, 1
          %s478 = scalar_lea.sflag [#allocation9], %s477
          %s479 = sand.u32 %s108, 1
          %s480 = scalar_lea.vmem [#allocation12], %s479
          %481 = dma.done %s478, 16
        $region59: #{tpu_custom_call.1} parent=54 // pred_fallthru
          _
      $region55: #{tpu_custom_call.1} parent=5 // pred_fallthru
        _
    $region6: #{tpu_custom_call.1} parent=1 // loop_footer
      %s30 = sadd.s32 1, %s26
    $region7: #{tpu_custom_call.1} parent=1 // loop_footer_branch
      %25 = sbr.rel target = $region3
    $region8: #{tpu_custom_call.1} parent=1 // loop_exit
      _
    %482 = vsyncpa [#allocation8], 1
    %s483 = scalar_lea.sflag [#allocation8], 1
    %484 = vsyncpa %s483, 1
    %485 = vsyncpa [#allocation11], 1
    %486 = vsyncpa [#allocation9], 1
    %s487 = scalar_lea.sflag [#allocation9], 1
    %488 = vsyncpa %s487, 1

</llo_original>
